<compile_context>
chip_gen: v6e
topology: v6e:2x2x1
jax: 0.10.0
libtpu: 0.0.40
codegen_flags: <defaults>
</compile_context>

<pallas_src>
import jax
import jax.numpy as jnp
from jax.experimental import pallas as pl
from jax.experimental.pallas import tpu as pltpu

NUM_LAYERS = 6
HIDDEN = 32
LANES = 128
COMPUTE_DTYPE = jnp.bfloat16  # MXU-native input dtype; accumulation is f32.


def _round_up(n, m):
    return ((n + m - 1) // m) * m


def qnet_kernel(x_ref, w_ref, b_ref, out_ref):
    """Fused 6-layer MLP on a lane-packed batch tile.

    x_ref:   (TILE, P) f32   -- each packed row holds PACK batch rows, SLOT lanes each
    w_ref:   (6, P, P) bf16  -- block-diagonal (PACK copies of each SLOTxSLOT W)
    b_ref:   (6, 1, P) f32   -- bias tiled PACK times
    out_ref: (TILE, P) f32
    """
    # Cast f32 -> bf16 in-kernel (free VPU filler; avoids a wrapper HBM pass).
    h = x_ref[...].astype(COMPUTE_DTYPE)
    for layer in range(NUM_LAYERS - 1):
        z = jnp.dot(h, w_ref[layer], preferred_element_type=jnp.float32) + b_ref[layer]
        h = jnp.tanh(z).astype(COMPUTE_DTYPE)  # tanh in f32 (v5e-safe), store bf16
    out_ref[...] = (
        jnp.dot(h, w_ref[NUM_LAYERS - 1], preferred_element_type=jnp.float32)
        + b_ref[NUM_LAYERS - 1]
    ).astype(out_ref.dtype)


def pack_qnetwork_params(params):
    """Pack 6 (W_t, b) pairs into a block-diagonal bf16 weight stack and a tiled
    f32 bias stack.

    W_t is (in_features, out_features); b is (out_features,).  Each layer's weight
    is zero-padded to (SLOT, SLOT) and replicated PACK times along the diagonal of
    a (P, P) block so that PACK independent batch rows share one 128-lane vreg row.
    Zero padding keeps padded input lanes inert and padded output lanes exactly 0.

    Returns (w_stack (6,P,P) bf16, b_stack (6,1,P) f32, slot).
    """
    state_dim = params[0][0].shape[0]
    action_dim = params[-1][0].shape[1]
    slot = max(HIDDEN, _round_up(state_dim, 8), _round_up(action_dim, 8))
    pack = max(1, LANES // slot)  # 4 for the standard slot=32 case
    p = pack * slot

    w_stack = jnp.zeros((NUM_LAYERS, p, p), COMPUTE_DTYPE)
    b_stack = jnp.zeros((NUM_LAYERS, 1, p), jnp.float32)
    for layer, (w_t, b) in enumerate(params):
        fi, fo = w_t.shape
        w_slot = jnp.zeros((slot, slot), jnp.float32).at[:fi, :fo].set(
            w_t.astype(jnp.float32))
        b_slot = jnp.zeros((slot,), jnp.float32).at[:fo].set(
            b.reshape(-1).astype(jnp.float32))
        for c in range(pack):
            w_stack = w_stack.at[
                layer, c * slot:(c + 1) * slot, c * slot:(c + 1) * slot
            ].set(w_slot.astype(COMPUTE_DTYPE))
        b_stack = b_stack.at[layer, 0].set(jnp.tile(b_slot, pack))
    return w_stack, b_stack, slot


def qnetwork_forward(x, w_stack, b_stack, slot, action_dim, *, max_tile_rows=1024):
    """x: (B, state_dim) float32. Returns (B, action_dim) float32 Q-values."""
    batch, state_dim = x.shape
    p = w_stack.shape[-1]
    pack = p // slot
    assert state_dim <= slot, "state_dim exceeds packed slot width"

    # Packed rows needed (each packed row carries `pack` batch rows).
    rows = pl.cdiv(batch, pack)

    # Tile in packed rows: multiple of 8 sublanes, capped at max_tile_rows
    # (1024 packed rows = 4096 batch rows; ~0.5 MiB/buffer -> far under VMEM).
    tile = min(max_tile_rows, _round_up(rows, 8))
    # v7x megacore: when the whole batch would be a single grid step and there is
    # enough work, split into (at least) 2 steps so both TensorCores are used.
    if rows > 8 and tile >= rows:
        tile = max(8, _round_up(pl.cdiv(rows, 2), 8))
    num_tiles = pl.cdiv(rows, tile)
    rows_pad = num_tiles * tile
    b_pad = rows_pad * pack

    # Single pad op (f32 stays f32: the bf16 cast happens inside the kernel).
    x_pad = jnp.pad(x, ((0, b_pad - batch), (0, slot - state_dim)))
    # Free, contiguous reshape to the lane-packed layout.
    x_packed = x_pad.reshape(rows_pad, p)

    out_packed = pl.pallas_call(
        qnet_kernel,
        out_shape=jax.ShapeDtypeStruct((rows_pad, p), jnp.float32),
        grid_spec=pltpu.PrefetchScalarGridSpec(
            num_scalar_prefetch=0,
            grid=(num_tiles,),
            in_specs=[
                # Per-step lane-dense batch tile of activations (f32 in HBM).
                pl.BlockSpec((tile, p), lambda i: (i, 0)),
                # Weight/bias stacks: same block every step -> VMEM-resident.
                pl.BlockSpec((NUM_LAYERS, p, p), lambda i: (0, 0, 0)),
                pl.BlockSpec((NUM_LAYERS, 1, p), lambda i: (0, 0, 0)),
            ],
            out_specs=pl.BlockSpec((tile, p), lambda i: (i, 0)),
        ),
        compiler_params=pltpu.CompilerParams(
            dimension_semantics=("parallel",),  # megacore sharding on v7x
        ),
    )(x_packed, w_stack, b_stack)

    # Unpack lanes back to (batch, action_dim); padded lanes/rows are exactly 0.
    return out_packed.reshape(b_pad, slot)[:batch, :action_dim]


def init_linear_params(key, in_features, out_features):
    """Deterministic init matching nn.Linear's U(-1/sqrt(in), 1/sqrt(in)) scheme.
    Weight stored transposed as (in, out) so the kernel computes x @ W."""
    kw, kb = jax.random.split(key)
    bound = 1.0 / jnp.sqrt(jnp.float32(in_features))
    w_t = jax.random.uniform(kw, (in_features, out_features), jnp.float32, -bound, bound)
    b = jax.random.uniform(kb, (out_features,), jnp.float32, -bound, bound)
    return w_t, b


def make_qnetwork_params(key, state_dim, action_dim, hidden=HIDDEN):
    dims = [(state_dim, hidden), (hidden, hidden), (hidden, hidden),
            (hidden, hidden), (hidden, hidden), (hidden, action_dim)]
    keys = jax.random.split(key, len(dims))
    return [init_linear_params(k, i, o) for k, (i, o) in zip(keys, dims)]


def qnetwork_reference(x, params, matmul_dtype=jnp.float32):
    """Plain-JAX reference. With matmul_dtype=bfloat16 it mirrors the kernel's
    bf16-input / f32-accumulate matmuls for a tight numerical comparison."""
    h = x
    for idx, (w_t, b) in enumerate(params):
        z = jnp.dot(h.astype(matmul_dtype), w_t.astype(matmul_dtype),
                    preferred_element_type=jnp.float32) + b.reshape(1, -1)
        h = z if idx == len(params) - 1 else jnp.tanh(z)
    return h


if __name__ == "__main__":
    key = jax.random.PRNGKey(0)
    k_params, k_x = jax.random.split(key)

    batch, state_dim, action_dim = 2, 8, 4
    params = make_qnetwork_params(k_params, state_dim, action_dim)
    x = jax.random.normal(k_x, (batch, state_dim), jnp.float32)

    w_stack, b_stack, slot = pack_qnetwork_params(params)
    out = qnetwork_forward(x, w_stack, b_stack, slot, action_dim)
    out = jax.block_until_ready(out)

    assert out.shape == (batch, action_dim)

    # Tight check against a bf16-matmul-matched reference.
    ref_bf16 = qnetwork_reference(x, params, matmul_dtype=jnp.bfloat16)
    assert jnp.allclose(out, ref_bf16, atol=2e-3, rtol=2e-3), "mismatch vs bf16 reference"

    # Loose sanity check against the full-f32 reference (bf16 rounding only).
    ref_f32 = qnetwork_reference(x, params, matmul_dtype=jnp.float32)
    assert jnp.allclose(out, ref_f32, atol=5e-2, rtol=5e-2), "mismatch vs f32 reference"

    print("KERNEL_OK")
</pallas_src>

<mosaic_0001>
module attributes {stable_mosaic.version = 11 : i64} {
  func.func @qnet_kernel(%arg0: i32, %arg1: memref<8x128xf32, #tpu.memory_space<vmem>>, %arg2: memref<6x128x128xbf16, #tpu.memory_space<vmem>>, %arg3: memref<6x1x128xf32, #tpu.memory_space<vmem>>, %arg4: memref<8x128xf32, #tpu.memory_space<vmem>>) attributes {dimension_semantics = [#tpu.dimension_semantics<parallel>], iteration_bounds = array<i64: 1>, scalar_prefetch = 0 : i64, scratch_operands = 0 : i64, tpu.core_type = #tpu.core_type<tc>, window_params = [{transform_indices = @transform_0, window_bounds = array<i64: 8, 128>}, {pipeline_mode = #tpu.pipeline_mode<synchronous>, transform_indices = @transform_1, window_bounds = array<i64: 6, 128, 128>}, {pipeline_mode = #tpu.pipeline_mode<synchronous>, transform_indices = @transform_2, window_bounds = array<i64: 6, 1, 128>}, {transform_indices = @transform_3, window_bounds = array<i64: 8, 128>}]} {
    %c0 = arith.constant 0 : index
    %c0_0 = arith.constant 0 : index
    %0 = vector.load %arg1[%c0, %c0_0] : memref<8x128xf32, #tpu.memory_space<vmem>>, vector<8x128xf32>
    %1 = arith.truncf %0 : vector<8x128xf32> to vector<8x128xbf16>
    %c0_1 = arith.constant 0 : index
    %c0_2 = arith.constant 0 : index
    %c0_3 = arith.constant 0 : index
    %2 = vector.load %arg2[%c0_1, %c0_2, %c0_3] : memref<6x128x128xbf16, #tpu.memory_space<vmem>>, vector<1x128x128xbf16>
    %3 = vector.shape_cast %2 : vector<1x128x128xbf16> to vector<128x128xbf16>
    %cst = arith.constant dense<0.000000e+00> : vector<8x128xf32>
    %4 = tpu.matmul %1, %3, %cst {dimension_numbers = #tpu.dot_dimension_numbers<[1], [0], [0], [1], [0, 0, 1, 1], [], []>} : vector<8x128xbf16>, vector<128x128xbf16>, vector<8x128xf32> -> vector<8x128xf32>
    %c0_4 = arith.constant 0 : index
    %c0_5 = arith.constant 0 : index
    %c0_6 = arith.constant 0 : index
    %5 = vector.load %arg3[%c0_4, %c0_5, %c0_6] : memref<6x1x128xf32, #tpu.memory_space<vmem>>, vector<1x1x128xf32>
    %6 = vector.shape_cast %5 : vector<1x1x128xf32> to vector<1x128xf32>
    %7 = vector.broadcast %6 : vector<1x128xf32> to vector<8x128xf32>
    %8 = arith.addf %4, %7 : vector<8x128xf32>
    %9 = math.tanh %8 : vector<8x128xf32>
    %10 = arith.truncf %9 : vector<8x128xf32> to vector<8x128xbf16>
    %c1 = arith.constant 1 : index
    %c0_7 = arith.constant 0 : index
    %c0_8 = arith.constant 0 : index
    %11 = vector.load %arg2[%c1, %c0_7, %c0_8] : memref<6x128x128xbf16, #tpu.memory_space<vmem>>, vector<1x128x128xbf16>
    %12 = vector.shape_cast %11 : vector<1x128x128xbf16> to vector<128x128xbf16>
    %cst_9 = arith.constant dense<0.000000e+00> : vector<8x128xf32>
    %13 = tpu.matmul %10, %12, %cst_9 {dimension_numbers = #tpu.dot_dimension_numbers<[1], [0], [0], [1], [0, 0, 1, 1], [], []>} : vector<8x128xbf16>, vector<128x128xbf16>, vector<8x128xf32> -> vector<8x128xf32>
    %c1_10 = arith.constant 1 : index
    %c0_11 = arith.constant 0 : index
    %c0_12 = arith.constant 0 : index
    %14 = vector.load %arg3[%c1_10, %c0_11, %c0_12] : memref<6x1x128xf32, #tpu.memory_space<vmem>>, vector<1x1x128xf32>
    %15 = vector.shape_cast %14 : vector<1x1x128xf32> to vector<1x128xf32>
    %16 = vector.broadcast %15 : vector<1x128xf32> to vector<8x128xf32>
    %17 = arith.addf %13, %16 : vector<8x128xf32>
    %18 = math.tanh %17 : vector<8x128xf32>
    %19 = arith.truncf %18 : vector<8x128xf32> to vector<8x128xbf16>
    %c2 = arith.constant 2 : index
    %c0_13 = arith.constant 0 : index
    %c0_14 = arith.constant 0 : index
    %20 = vector.load %arg2[%c2, %c0_13, %c0_14] : memref<6x128x128xbf16, #tpu.memory_space<vmem>>, vector<1x128x128xbf16>
    %21 = vector.shape_cast %20 : vector<1x128x128xbf16> to vector<128x128xbf16>
    %cst_15 = arith.constant dense<0.000000e+00> : vector<8x128xf32>
    %22 = tpu.matmul %19, %21, %cst_15 {dimension_numbers = #tpu.dot_dimension_numbers<[1], [0], [0], [1], [0, 0, 1, 1], [], []>} : vector<8x128xbf16>, vector<128x128xbf16>, vector<8x128xf32> -> vector<8x128xf32>
    %c2_16 = arith.constant 2 : index
    %c0_17 = arith.constant 0 : index
    %c0_18 = arith.constant 0 : index
    %23 = vector.load %arg3[%c2_16, %c0_17, %c0_18] : memref<6x1x128xf32, #tpu.memory_space<vmem>>, vector<1x1x128xf32>
    %24 = vector.shape_cast %23 : vector<1x1x128xf32> to vector<1x128xf32>
    %25 = vector.broadcast %24 : vector<1x128xf32> to vector<8x128xf32>
    %26 = arith.addf %22, %25 : vector<8x128xf32>
    %27 = math.tanh %26 : vector<8x128xf32>
    %28 = arith.truncf %27 : vector<8x128xf32> to vector<8x128xbf16>
    %c3 = arith.constant 3 : index
    %c0_19 = arith.constant 0 : index
    %c0_20 = arith.constant 0 : index
    %29 = vector.load %arg2[%c3, %c0_19, %c0_20] : memref<6x128x128xbf16, #tpu.memory_space<vmem>>, vector<1x128x128xbf16>
    %30 = vector.shape_cast %29 : vector<1x128x128xbf16> to vector<128x128xbf16>
    %cst_21 = arith.constant dense<0.000000e+00> : vector<8x128xf32>
    %31 = tpu.matmul %28, %30, %cst_21 {dimension_numbers = #tpu.dot_dimension_numbers<[1], [0], [0], [1], [0, 0, 1, 1], [], []>} : vector<8x128xbf16>, vector<128x128xbf16>, vector<8x128xf32> -> vector<8x128xf32>
    %c3_22 = arith.constant 3 : index
    %c0_23 = arith.constant 0 : index
    %c0_24 = arith.constant 0 : index
    %32 = vector.load %arg3[%c3_22, %c0_23, %c0_24] : memref<6x1x128xf32, #tpu.memory_space<vmem>>, vector<1x1x128xf32>
    %33 = vector.shape_cast %32 : vector<1x1x128xf32> to vector<1x128xf32>
    %34 = vector.broadcast %33 : vector<1x128xf32> to vector<8x128xf32>
    %35 = arith.addf %31, %34 : vector<8x128xf32>
    %36 = math.tanh %35 : vector<8x128xf32>
    %37 = arith.truncf %36 : vector<8x128xf32> to vector<8x128xbf16>
    %c4 = arith.constant 4 : index
    %c0_25 = arith.constant 0 : index
    %c0_26 = arith.constant 0 : index
    %38 = vector.load %arg2[%c4, %c0_25, %c0_26] : memref<6x128x128xbf16, #tpu.memory_space<vmem>>, vector<1x128x128xbf16>
    %39 = vector.shape_cast %38 : vector<1x128x128xbf16> to vector<128x128xbf16>
    %cst_27 = arith.constant dense<0.000000e+00> : vector<8x128xf32>
    %40 = tpu.matmul %37, %39, %cst_27 {dimension_numbers = #tpu.dot_dimension_numbers<[1], [0], [0], [1], [0, 0, 1, 1], [], []>} : vector<8x128xbf16>, vector<128x128xbf16>, vector<8x128xf32> -> vector<8x128xf32>
    %c4_28 = arith.constant 4 : index
    %c0_29 = arith.constant 0 : index
    %c0_30 = arith.constant 0 : index
    %41 = vector.load %arg3[%c4_28, %c0_29, %c0_30] : memref<6x1x128xf32, #tpu.memory_space<vmem>>, vector<1x1x128xf32>
    %42 = vector.shape_cast %41 : vector<1x1x128xf32> to vector<1x128xf32>
    %43 = vector.broadcast %42 : vector<1x128xf32> to vector<8x128xf32>
    %44 = arith.addf %40, %43 : vector<8x128xf32>
    %45 = math.tanh %44 : vector<8x128xf32>
    %46 = arith.truncf %45 : vector<8x128xf32> to vector<8x128xbf16>
    %c5 = arith.constant 5 : index
    %c0_31 = arith.constant 0 : index
    %c0_32 = arith.constant 0 : index
    %47 = vector.load %arg2[%c5, %c0_31, %c0_32] : memref<6x128x128xbf16, #tpu.memory_space<vmem>>, vector<1x128x128xbf16>
    %48 = vector.shape_cast %47 : vector<1x128x128xbf16> to vector<128x128xbf16>
    %cst_33 = arith.constant dense<0.000000e+00> : vector<8x128xf32>
    %49 = tpu.matmul %46, %48, %cst_33 {dimension_numbers = #tpu.dot_dimension_numbers<[1], [0], [0], [1], [0, 0, 1, 1], [], []>} : vector<8x128xbf16>, vector<128x128xbf16>, vector<8x128xf32> -> vector<8x128xf32>
    %c5_34 = arith.constant 5 : index
    %c0_35 = arith.constant 0 : index
    %c0_36 = arith.constant 0 : index
    %50 = vector.load %arg3[%c5_34, %c0_35, %c0_36] : memref<6x1x128xf32, #tpu.memory_space<vmem>>, vector<1x1x128xf32>
    %51 = vector.shape_cast %50 : vector<1x1x128xf32> to vector<1x128xf32>
    %52 = vector.broadcast %51 : vector<1x128xf32> to vector<8x128xf32>
    %53 = arith.addf %49, %52 : vector<8x128xf32>
    %c0_37 = arith.constant 0 : index
    %c0_38 = arith.constant 0 : index
    %54 = vector.load %arg4[%c0_37, %c0_38] : memref<8x128xf32, #tpu.memory_space<vmem>>, vector<8x128xf32>
    tpu.vector_store %arg4[%c0_37, %c0_38], %53 {strides = array<i32>} : memref<8x128xf32, #tpu.memory_space<vmem>>, vector<8x128xf32>,
    return
  }
  func.func @transform_0(%arg0: i32) -> (i32, i32) {
    %c0_i32 = arith.constant 0 : i32
    %c0_i32_0 = arith.constant 0 : i32
    return %arg0, %c0_i32 : i32, i32
  }
  func.func @transform_1(%arg0: i32) -> (i32, i32, i32) {
    %c0_i32 = arith.constant 0 : i32
    %c0_i32_0 = arith.constant 0 : i32
    %c0_i32_1 = arith.constant 0 : i32
    %c0_i32_2 = arith.constant 0 : i32
    return %c0_i32, %c0_i32_0, %c0_i32_1 : i32, i32, i32
  }
  func.func @transform_2(%arg0: i32) -> (i32, i32, i32) {
    %c0_i32 = arith.constant 0 : i32
    %c0_i32_0 = arith.constant 0 : i32
    %c0_i32_1 = arith.constant 0 : i32
    %c0_i32_2 = arith.constant 0 : i32
    return %c0_i32, %c0_i32_0, %c0_i32_1 : i32, i32, i32
  }
  func.func @transform_3(%arg0: i32) -> (i32, i32) {
    %c0_i32 = arith.constant 0 : i32
    %c0_i32_0 = arith.constant 0 : i32
    return %arg0, %c0_i32 : i32, i32
  }
}

</mosaic_0001>

<llo_original>
// kernel: tpu_custom_call.1
$region0: #{tpu_custom_call.1}
  #allocation0 [shape = 'u32[]', space=smem, size = 0x4, offset = 0x4, fixed_abs, tag = 'smem constant byte address 0x4 - core index']
  #allocation1 [shape = 'u32[144,128]{1,0:T(1,128)}', space=vmem, size = 0x12000, scoped, tag = 'internal scratch']
  %s0 = inlined_call_operand.hbm [shape: f32[8,128], index: 0, kind: input, shape index: {}]
  %s1 = inlined_call_operand.hbm [shape: bf16[6,128,128], index: 1, kind: input, shape index: {}]
  %s2 = inlined_call_operand.hbm [shape: f32[6,1,128], index: 2, kind: input, shape index: {}]
  %s3 = inlined_call_operand.hbm [shape: f32[8,128], index: 3, kind: output, shape index: {}]
  %s4 = sld [smem:[#allocation0]]
  $region34: #{tpu_custom_call.1} parent=0
    _
  %s6 = ssub.s32 1, %s4
  %s7 = scalar_select 0, %s6, %s4
  $region1: #{tpu_custom_call.1} parent=0
    #allocation2 [shape = 'u8[4096]{0}', space=vmem, size = 0x1000, scoped, tag = 'input window, operand 0, single buffered']
    #allocation3 [shape = 's32[1]{0}', space=sflag, size = 0x4, scoped, tag = 'scoped memory for tpu_custom_call.1']
    #allocation4 [shape = 's32[1]{0}', space=sflag, size = 0x4, scoped, tag = 'scoped memory for tpu_custom_call.1']
    #allocation5 [shape = 'u8[196608]{0}', space=vmem, size = 0x30000, scoped, tag = 'input window, operand 1, single buffered']
    #allocation6 [shape = 's32[1]{0}', space=sflag, size = 0x4, scoped, tag = 'scoped memory for tpu_custom_call.1']
    #allocation7 [shape = 'u8[3072]{0}', space=vmem, size = 0xc00, scoped, tag = 'input window, operand 2, single buffered']
    #allocation8 [shape = 'u8[4096]{0}', space=vmem, size = 0x1000, scoped, tag = 'output window, operand 0, single buffered']
    %8 = vsyncpa [#allocation3], 0
    %9 = vsyncpa [#allocation6], 0
    %10 = vsyncpa [#allocation4], 0
    // Predicated region
    $region2: #{tpu_custom_call.1} parent=1 // pred_check
      _
    $region3: #{tpu_custom_call.1} parent=1 // pred_check_branch
      %12 = sbr.rel (0) target = $region5
    $region4: #{tpu_custom_call.1} parent=1 // pred_region
      %s14 = ssub.s32 128, 128
      %15 = vsyncadd [#allocation3], %s14
      %s17 = sshll.u32 [#allocation2], 4
      %s18 = int_to_ptr.vmem [resolvable:$true] %s17
      %20 = dma.hbm_to_vmem [thread:$0]  %s0, 128, %s18, [#allocation3]
    $region5: #{tpu_custom_call.1} parent=1 // pred_fallthru
      _
    // Predicated region
    $region6: #{tpu_custom_call.1} parent=1 // pred_check
      _
    $region7: #{tpu_custom_call.1} parent=1 // pred_check_branch
      %22 = sbr.rel (0) target = $region9
    $region8: #{tpu_custom_call.1} parent=1 // pred_region
      %s24 = ssub.s32 6144, 6144
      %25 = vsyncadd [#allocation6], %s24
      %s26 = sshll.u32 [#allocation5], 4
      %s27 = int_to_ptr.vmem [resolvable:$true] %s26
      %32 = dma.hbm_to_vmem [thread:$0]  %s1, 6144, %s27, [#allocation6], 64, 64, 4
    $region9: #{tpu_custom_call.1} parent=1 // pred_fallthru
      _
    // Predicated region
    $region10: #{tpu_custom_call.1} parent=1 // pred_check
      _
    $region11: #{tpu_custom_call.1} parent=1 // pred_check_branch
      %34 = sbr.rel (0) target = $region13
    $region12: #{tpu_custom_call.1} parent=1 // pred_region
      %s36 = ssub.s32 96, 96
      %37 = vsyncadd [#allocation6], %s36
      %s38 = sshll.u32 [#allocation7], 4
      %s39 = int_to_ptr.vmem [resolvable:$true] %s38
      %44 = dma.hbm_to_vmem [thread:$0]  %s2, 96, %s39, [#allocation6], 16, 16, 1
    $region13: #{tpu_custom_call.1} parent=1 // pred_fallthru
      _
    // Predicated region
    $region14: #{tpu_custom_call.1} parent=1 // pred_check
      _
    $region15: #{tpu_custom_call.1} parent=1 // pred_check_branch
      %46 = sbr.rel (0) target = $region17
    $region16: #{tpu_custom_call.1} parent=1 // pred_region
      %47 = dma.done [#allocation3], 128
    $region17: #{tpu_custom_call.1} parent=1 // pred_fallthru
      _
    // Predicated region
    $region18: #{tpu_custom_call.1} parent=1 // pred_check
      _
    $region19: #{tpu_custom_call.1} parent=1 // pred_check_branch
      %49 = sbr.rel (0) target = $region21
    $region20: #{tpu_custom_call.1} parent=1 // pred_region
      %50 = dma.done [#allocation6], 6144
    $region21: #{tpu_custom_call.1} parent=1 // pred_fallthru
      _
    // Predicated region
    $region22: #{tpu_custom_call.1} parent=1 // pred_check
      _
    $region23: #{tpu_custom_call.1} parent=1 // pred_check_branch
      %52 = sbr.rel (0) target = $region25
    $region24: #{tpu_custom_call.1} parent=1 // pred_region
      %53 = dma.done [#allocation6], 96
    $region25: #{tpu_custom_call.1} parent=1 // pred_fallthru
      _
    %v55 = vld [vmem:[#allocation2] sm:$0xff]
    %v56 = vpack.c.bf16 %v55, %v55
    %v57 = vld [vmem:[#allocation5] sm:$0xf]
    %v58 = vld [vmem:[#allocation5 + $0x4] sm:$0xf]
    %v59 = vld [vmem:[#allocation5 + $0x8] sm:$0xf]
    %v60 = vld [vmem:[#allocation5 + $0xc] sm:$0xf]
    %v61 = vld [vmem:[#allocation5 + $0x10] sm:$0xf]
    %v62 = vld [vmem:[#allocation5 + $0x14] sm:$0xf]
    %v63 = vld [vmem:[#allocation5 + $0x18] sm:$0xf]
    %v64 = vld [vmem:[#allocation5 + $0x1c] sm:$0xf]
    %v65 = vld [vmem:[#allocation5 + $0x20] sm:$0xf]
    %v66 = vld [vmem:[#allocation5 + $0x24] sm:$0xf]
    %v67 = vld [vmem:[#allocation5 + $0x28] sm:$0xf]
    %v68 = vld [vmem:[#allocation5 + $0x2c] sm:$0xf]
    %v69 = vld [vmem:[#allocation5 + $0x30] sm:$0xf]
    %v70 = vld [vmem:[#allocation5 + $0x34] sm:$0xf]
    %v71 = vld [vmem:[#allocation5 + $0x38] sm:$0xf]
    %v72 = vld [vmem:[#allocation5 + $0x3c] sm:$0xf]
    %v73 = vld [vmem:[#allocation7] sm:$0x1]
    %v75 = vlaneseq
    %v76 = vshrl.u32 %v75, 7
    %v77 = vsub.s32 0, %v76
    %v78 = vrot.slane %v73, %v77
    %v96 = vunpack.c.l.b16 %v57
    %v97 = vunpack.c.l.b16 %v58
    %v98 = vunpack.c.l.b16 %v59
    %v99 = vunpack.c.l.b16 %v60
    %v100 = vunpack.c.l.b16 %v61
    %v101 = vunpack.c.l.b16 %v62
    %v102 = vunpack.c.l.b16 %v63
    %v103 = vunpack.c.l.b16 %v64
    %v104 = vunpack.c.l.b16 %v65
    %v105 = vunpack.c.l.b16 %v66
    %v106 = vunpack.c.l.b16 %v67
    %v107 = vunpack.c.l.b16 %v68
    %v108 = vunpack.c.l.b16 %v69
    %v109 = vunpack.c.l.b16 %v70
    %v110 = vunpack.c.l.b16 %v71
    %v111 = vunpack.c.l.b16 %v72
    %v112 = vpack.c.b16 %v97, %v96
    %v113 = vpack.c.b16 %v99, %v98
    %v114 = vpack.c.b16 %v101, %v100
    %v115 = vpack.c.b16 %v103, %v102
    %v116 = vpack.c.b16 %v105, %v104
    %v117 = vpack.c.b16 %v107, %v106
    %v118 = vpack.c.b16 %v109, %v108
    %v119 = vpack.c.b16 %v111, %v110
    %128 = vmatprep.subr.bf16.mxu0 0
    %129 = vmatpush1.bf16.msra.mxu0 %v119
    %130 = vmatprep.subr.bf16.mxu0 0
    %131 = vmatpush1.bf16.msra.mxu0 %v118
    %132 = vmatprep.subr.bf16.mxu0 0
    %133 = vmatpush1.bf16.msra.mxu0 %v117
    %134 = vmatprep.subr.bf16.mxu0 0
    %135 = vmatpush1.bf16.msra.mxu0 %v116
    %136 = vmatprep.subr.bf16.mxu0 0
    %137 = vmatpush1.bf16.msra.mxu0 %v115
    %138 = vmatprep.subr.bf16.mxu0 0
    %139 = vmatpush1.bf16.msra.mxu0 %v114
    %140 = vmatprep.subr.bf16.mxu0 0
    %141 = vmatpush1.bf16.msra.mxu0 %v113
    %142 = vmatprep.subr.bf16.mxu0 0
    %143 = vmatpush1.bf16.msra.mxu0 %v112
    %144 = vmatprep.subr.bf16.mxu0 0
    %145 = vmatpush2.bf16.msra.mxu0 0
    %146 = vmatprep.subr.bf16.mxu0 0
    %147 = vmatpush2.bf16.msra.mxu0 0
    %148 = vmatprep.subr.bf16.mxu0 0
    %149 = vmatpush2.bf16.msra.mxu0 0
    %150 = vmatprep.subr.bf16.mxu0 0
    %151 = vmatpush2.bf16.msra.mxu0 0
    %152 = vmatprep.subr.bf16.mxu0 0
    %153 = vmatpush2.bf16.msra.mxu0 0
    %154 = vmatprep.subr.bf16.mxu0 0
    %155 = vmatpush2.bf16.msra.mxu0 0
    %156 = vmatprep.subr.bf16.mxu0 0
    %157 = vmatpush2.bf16.msra.mxu0 0
    %158 = vmatprep.subr.bf16.mxu0 0
    %159 = vmatpush2.bf16.msra.mxu0 0
    %160 = vmatprep.mubr.bf16.mxu0 0
    %161 = vmatmul.mubr.bf16.gmra.mxu0 %v56
    %v162 = vpop.f32.mrf.mxu0
    %v163 = vadd.f32 %v78, %v162
    %v164 = vpop.f32.mrf.mxu0
    %v165 = vpop.f32.mrf.mxu0
    %v166 = vpop.f32.mrf.mxu0
    %167 = vdwg.mxu0
    %v168 = vtanh.pop %v163
    %v169 = vpack.c.bf16 %v168, %v168
    %s170 = scalar_lea.vmem [#allocation5], 64
    %v171 = vld [vmem:[%s170] sm:$0xf]
    %v172 = vld [vmem:[%s170 + $0x4] sm:$0xf]
    %v173 = vld [vmem:[%s170 + $0x8] sm:$0xf]
    %v174 = vld [vmem:[%s170 + $0xc] sm:$0xf]
    %v175 = vld [vmem:[%s170 + $0x10] sm:$0xf]
    %v176 = vld [vmem:[%s170 + $0x14] sm:$0xf]
    %v177 = vld [vmem:[%s170 + $0x18] sm:$0xf]
    %v178 = vld [vmem:[%s170 + $0x1c] sm:$0xf]
    %v179 = vld [vmem:[%s170 + $0x20] sm:$0xf]
    %v180 = vld [vmem:[%s170 + $0x24] sm:$0xf]
    %v181 = vld [vmem:[%s170 + $0x28] sm:$0xf]
    %v182 = vld [vmem:[%s170 + $0x2c] sm:$0xf]
    %v183 = vld [vmem:[%s170 + $0x30] sm:$0xf]
    %v184 = vld [vmem:[%s170 + $0x34] sm:$0xf]
    %v185 = vld [vmem:[%s170 + $0x38] sm:$0xf]
    %v186 = vld [vmem:[%s170 + $0x3c] sm:$0xf]
    %s187 = scalar_lea.vmem [#allocation7], 1
    %v188 = vld [vmem:[%s187] sm:$0x1]
    %v190 = vlaneseq
    %v191 = vshrl.u32 %v190, 7
    %v192 = vsub.s32 0, %v191
    %v193 = vrot.slane %v188, %v192
    %v211 = vunpack.c.l.b16 %v171
    %v212 = vunpack.c.l.b16 %v172
    %v213 = vunpack.c.l.b16 %v173
    %v214 = vunpack.c.l.b16 %v174
    %v215 = vunpack.c.l.b16 %v175
    %v216 = vunpack.c.l.b16 %v176
    %v217 = vunpack.c.l.b16 %v177
    %v218 = vunpack.c.l.b16 %v178
    %v219 = vunpack.c.l.b16 %v179
    %v220 = vunpack.c.l.b16 %v180
    %v221 = vunpack.c.l.b16 %v181
    %v222 = vunpack.c.l.b16 %v182
    %v223 = vunpack.c.l.b16 %v183
    %v224 = vunpack.c.l.b16 %v184
    %v225 = vunpack.c.l.b16 %v185
    %v226 = vunpack.c.l.b16 %v186
    %v227 = vpack.c.b16 %v212, %v211
    %v228 = vpack.c.b16 %v214, %v213
    %v229 = vpack.c.b16 %v216, %v215
    %v230 = vpack.c.b16 %v218, %v217
    %v231 = vpack.c.b16 %v220, %v219
    %v232 = vpack.c.b16 %v222, %v221
    %v233 = vpack.c.b16 %v224, %v223
    %v234 = vpack.c.b16 %v226, %v225
    %243 = vmatprep.subr.bf16.mxu0 0
    %244 = vmatpush1.bf16.msra.mxu0 %v234
    %245 = vmatprep.subr.bf16.mxu0 0
    %246 = vmatpush1.bf16.msra.mxu0 %v233
    %247 = vmatprep.subr.bf16.mxu0 0
    %248 = vmatpush1.bf16.msra.mxu0 %v232
    %249 = vmatprep.subr.bf16.mxu0 0
    %250 = vmatpush1.bf16.msra.mxu0 %v231
    %251 = vmatprep.subr.bf16.mxu0 0
    %252 = vmatpush1.bf16.msra.mxu0 %v230
    %253 = vmatprep.subr.bf16.mxu0 0
    %254 = vmatpush1.bf16.msra.mxu0 %v229
    %255 = vmatprep.subr.bf16.mxu0 0
    %256 = vmatpush1.bf16.msra.mxu0 %v228
    %257 = vmatprep.subr.bf16.mxu0 0
    %258 = vmatpush1.bf16.msra.mxu0 %v227
    %259 = vmatprep.subr.bf16.mxu0 0
    %260 = vmatpush2.bf16.msra.mxu0 0
    %261 = vmatprep.subr.bf16.mxu0 0
    %262 = vmatpush2.bf16.msra.mxu0 0
    %263 = vmatprep.subr.bf16.mxu0 0
    %264 = vmatpush2.bf16.msra.mxu0 0
    %265 = vmatprep.subr.bf16.mxu0 0
    %266 = vmatpush2.bf16.msra.mxu0 0
    %267 = vmatprep.subr.bf16.mxu0 0
    %268 = vmatpush2.bf16.msra.mxu0 0
    %269 = vmatprep.subr.bf16.mxu0 0
    %270 = vmatpush2.bf16.msra.mxu0 0
    %271 = vmatprep.subr.bf16.mxu0 0
    %272 = vmatpush2.bf16.msra.mxu0 0
    %273 = vmatprep.subr.bf16.mxu0 0
    %274 = vmatpush2.bf16.msra.mxu0 0
    %275 = vmatprep.mubr.bf16.mxu0 0
    %276 = vmatmul.mubr.bf16.gmra.mxu0 %v169
    %v277 = vpop.f32.mrf.mxu0
    %v278 = vadd.f32 %v193, %v277
    %v279 = vpop.f32.mrf.mxu0
    %v280 = vpop.f32.mrf.mxu0
    %v281 = vpop.f32.mrf.mxu0
    %282 = vdwg.mxu0
    %v283 = vtanh.pop %v278
    %v284 = vpack.c.bf16 %v283, %v283
    %s285 = scalar_lea.vmem [#allocation5], 128
    %v286 = vld [vmem:[%s285] sm:$0xf]
    %v287 = vld [vmem:[%s285 + $0x4] sm:$0xf]
    %v288 = vld [vmem:[%s285 + $0x8] sm:$0xf]
    %v289 = vld [vmem:[%s285 + $0xc] sm:$0xf]
    %v290 = vld [vmem:[%s285 + $0x10] sm:$0xf]
    %v291 = vld [vmem:[%s285 + $0x14] sm:$0xf]
    %v292 = vld [vmem:[%s285 + $0x18] sm:$0xf]
    %v293 = vld [vmem:[%s285 + $0x1c] sm:$0xf]
    %v294 = vld [vmem:[%s285 + $0x20] sm:$0xf]
    %v295 = vld [vmem:[%s285 + $0x24] sm:$0xf]
    %v296 = vld [vmem:[%s285 + $0x28] sm:$0xf]
    %v297 = vld [vmem:[%s285 + $0x2c] sm:$0xf]
    %v298 = vld [vmem:[%s285 + $0x30] sm:$0xf]
    %v299 = vld [vmem:[%s285 + $0x34] sm:$0xf]
    %v300 = vld [vmem:[%s285 + $0x38] sm:$0xf]
    %v301 = vld [vmem:[%s285 + $0x3c] sm:$0xf]
    %s302 = scalar_lea.vmem [#allocation7], 2
    %v303 = vld [vmem:[%s302] sm:$0x1]
    %v305 = vlaneseq
    %v306 = vshrl.u32 %v305, 7
    %v307 = vsub.s32 0, %v306
    %v308 = vrot.slane %v303, %v307
    %v326 = vunpack.c.l.b16 %v286
    %v327 = vunpack.c.l.b16 %v287
    %v328 = vunpack.c.l.b16 %v288
    %v329 = vunpack.c.l.b16 %v289
    %v330 = vunpack.c.l.b16 %v290
    %v331 = vunpack.c.l.b16 %v291
    %v332 = vunpack.c.l.b16 %v292
    %v333 = vunpack.c.l.b16 %v293
    %v334 = vunpack.c.l.b16 %v294
    %v335 = vunpack.c.l.b16 %v295
    %v336 = vunpack.c.l.b16 %v296
    %v337 = vunpack.c.l.b16 %v297
    %v338 = vunpack.c.l.b16 %v298
    %v339 = vunpack.c.l.b16 %v299
    %v340 = vunpack.c.l.b16 %v300
    %v341 = vunpack.c.l.b16 %v301
    %v342 = vpack.c.b16 %v327, %v326
    %v343 = vpack.c.b16 %v329, %v328
    %v344 = vpack.c.b16 %v331, %v330
    %v345 = vpack.c.b16 %v333, %v332
    %v346 = vpack.c.b16 %v335, %v334
    %v347 = vpack.c.b16 %v337, %v336
    %v348 = vpack.c.b16 %v339, %v338
    %v349 = vpack.c.b16 %v341, %v340
    %358 = vmatprep.subr.bf16.mxu0 0
    %359 = vmatpush1.bf16.msra.mxu0 %v349
    %360 = vmatprep.subr.bf16.mxu0 0
    %361 = vmatpush1.bf16.msra.mxu0 %v348
    %362 = vmatprep.subr.bf16.mxu0 0
    %363 = vmatpush1.bf16.msra.mxu0 %v347
    %364 = vmatprep.subr.bf16.mxu0 0
    %365 = vmatpush1.bf16.msra.mxu0 %v346
    %366 = vmatprep.subr.bf16.mxu0 0
    %367 = vmatpush1.bf16.msra.mxu0 %v345
    %368 = vmatprep.subr.bf16.mxu0 0
    %369 = vmatpush1.bf16.msra.mxu0 %v344
    %370 = vmatprep.subr.bf16.mxu0 0
    %371 = vmatpush1.bf16.msra.mxu0 %v343
    %372 = vmatprep.subr.bf16.mxu0 0
    %373 = vmatpush1.bf16.msra.mxu0 %v342
    %374 = vmatprep.subr.bf16.mxu0 0
    %375 = vmatpush2.bf16.msra.mxu0 0
    %376 = vmatprep.subr.bf16.mxu0 0
    %377 = vmatpush2.bf16.msra.mxu0 0
    %378 = vmatprep.subr.bf16.mxu0 0
    %379 = vmatpush2.bf16.msra.mxu0 0
    %380 = vmatprep.subr.bf16.mxu0 0
    %381 = vmatpush2.bf16.msra.mxu0 0
    %382 = vmatprep.subr.bf16.mxu0 0
    %383 = vmatpush2.bf16.msra.mxu0 0
    %384 = vmatprep.subr.bf16.mxu0 0
    %385 = vmatpush2.bf16.msra.mxu0 0
    %386 = vmatprep.subr.bf16.mxu0 0
    %387 = vmatpush2.bf16.msra.mxu0 0
    %388 = vmatprep.subr.bf16.mxu0 0
    %389 = vmatpush2.bf16.msra.mxu0 0
    %390 = vmatprep.mubr.bf16.mxu0 0
    %391 = vmatmul.mubr.bf16.gmra.mxu0 %v284
    %v392 = vpop.f32.mrf.mxu0
    %v393 = vadd.f32 %v308, %v392
    %v394 = vpop.f32.mrf.mxu0
    %v395 = vpop.f32.mrf.mxu0
    %v396 = vpop.f32.mrf.mxu0
    %397 = vdwg.mxu0
    %v398 = vtanh.pop %v393
    %v399 = vpack.c.bf16 %v398, %v398
    %s400 = scalar_lea.vmem [#allocation5], 192
    %v401 = vld [vmem:[%s400] sm:$0xf]
    %v402 = vld [vmem:[%s400 + $0x4] sm:$0xf]
    %v403 = vld [vmem:[%s400 + $0x8] sm:$0xf]
    %v404 = vld [vmem:[%s400 + $0xc] sm:$0xf]
    %v405 = vld [vmem:[%s400 + $0x10] sm:$0xf]
    %v406 = vld [vmem:[%s400 + $0x14] sm:$0xf]
    %v407 = vld [vmem:[%s400 + $0x18] sm:$0xf]
    %v408 = vld [vmem:[%s400 + $0x1c] sm:$0xf]
    %v409 = vld [vmem:[%s400 + $0x20] sm:$0xf]
    %v410 = vld [vmem:[%s400 + $0x24] sm:$0xf]
    %v411 = vld [vmem:[%s400 + $0x28] sm:$0xf]
    %v412 = vld [vmem:[%s400 + $0x2c] sm:$0xf]
    %v413 = vld [vmem:[%s400 + $0x30] sm:$0xf]
    %v414 = vld [vmem:[%s400 + $0x34] sm:$0xf]
    %v415 = vld [vmem:[%s400 + $0x38] sm:$0xf]
    %v416 = vld [vmem:[%s400 + $0x3c] sm:$0xf]
    %s417 = scalar_lea.vmem [#allocation7], 3
    %v418 = vld [vmem:[%s417] sm:$0x1]
    %v420 = vlaneseq
    %v421 = vshrl.u32 %v420, 7
    %v422 = vsub.s32 0, %v421
    %v423 = vrot.slane %v418, %v422
    %v441 = vunpack.c.l.b16 %v401
    %v442 = vunpack.c.l.b16 %v402
    %v443 = vunpack.c.l.b16 %v403
    %v444 = vunpack.c.l.b16 %v404
    %v445 = vunpack.c.l.b16 %v405
    %v446 = vunpack.c.l.b16 %v406
    %v447 = vunpack.c.l.b16 %v407
    %v448 = vunpack.c.l.b16 %v408
    %v449 = vunpack.c.l.b16 %v409
    %v450 = vunpack.c.l.b16 %v410
    %v451 = vunpack.c.l.b16 %v411
    %v452 = vunpack.c.l.b16 %v412
    %v453 = vunpack.c.l.b16 %v413
    %v454 = vunpack.c.l.b16 %v414
    %v455 = vunpack.c.l.b16 %v415
    %v456 = vunpack.c.l.b16 %v416
    %v457 = vpack.c.b16 %v442, %v441
    %v458 = vpack.c.b16 %v444, %v443
    %v459 = vpack.c.b16 %v446, %v445
    %v460 = vpack.c.b16 %v448, %v447
    %v461 = vpack.c.b16 %v450, %v449
    %v462 = vpack.c.b16 %v452, %v451
    %v463 = vpack.c.b16 %v454, %v453
    %v464 = vpack.c.b16 %v456, %v455
    %473 = vmatprep.subr.bf16.mxu0 0
    %474 = vmatpush1.bf16.msra.mxu0 %v464
    %475 = vmatprep.subr.bf16.mxu0 0
    %476 = vmatpush1.bf16.msra.mxu0 %v463
    %477 = vmatprep.subr.bf16.mxu0 0
    %478 = vmatpush1.bf16.msra.mxu0 %v462
    %479 = vmatprep.subr.bf16.mxu0 0
    %480 = vmatpush1.bf16.msra.mxu0 %v461
    %481 = vmatprep.subr.bf16.mxu0 0
    %482 = vmatpush1.bf16.msra.mxu0 %v460
    %483 = vmatprep.subr.bf16.mxu0 0
    %484 = vmatpush1.bf16.msra.mxu0 %v459
    %485 = vmatprep.subr.bf16.mxu0 0
    %486 = vmatpush1.bf16.msra.mxu0 %v458
    %487 = vmatprep.subr.bf16.mxu0 0
    %488 = vmatpush1.bf16.msra.mxu0 %v457
    %489 = vmatprep.subr.bf16.mxu0 0
    %490 = vmatpush2.bf16.msra.mxu0 0
    %491 = vmatprep.subr.bf16.mxu0 0
    %492 = vmatpush2.bf16.msra.mxu0 0
    %493 = vmatprep.subr.bf16.mxu0 0
    %494 = vmatpush2.bf16.msra.mxu0 0
    %495 = vmatprep.subr.bf16.mxu0 0
    %496 = vmatpush2.bf16.msra.mxu0 0
    %497 = vmatprep.subr.bf16.mxu0 0
    %498 = vmatpush2.bf16.msra.mxu0 0
    %499 = vmatprep.subr.bf16.mxu0 0
    %500 = vmatpush2.bf16.msra.mxu0 0
    %501 = vmatprep.subr.bf16.mxu0 0
    %502 = vmatpush2.bf16.msra.mxu0 0
    %503 = vmatprep.subr.bf16.mxu0 0
    %504 = vmatpush2.bf16.msra.mxu0 0
    %505 = vmatprep.mubr.bf16.mxu0 0
    %506 = vmatmul.mubr.bf16.gmra.mxu0 %v399
    %v507 = vpop.f32.mrf.mxu0
    %v508 = vadd.f32 %v423, %v507
    %v509 = vpop.f32.mrf.mxu0
    %v510 = vpop.f32.mrf.mxu0
    %v511 = vpop.f32.mrf.mxu0
    %512 = vdwg.mxu0
    %v513 = vtanh.pop %v508
    %v514 = vpack.c.bf16 %v513, %v513
    %s515 = scalar_lea.vmem [#allocation5], 256
    %v516 = vld [vmem:[%s515] sm:$0xf]
    %v517 = vld [vmem:[%s515 + $0x4] sm:$0xf]
    %v518 = vld [vmem:[%s515 + $0x8] sm:$0xf]
    %v519 = vld [vmem:[%s515 + $0xc] sm:$0xf]
    %v520 = vld [vmem:[%s515 + $0x10] sm:$0xf]
    %v521 = vld [vmem:[%s515 + $0x14] sm:$0xf]
    %v522 = vld [vmem:[%s515 + $0x18] sm:$0xf]
    %v523 = vld [vmem:[%s515 + $0x1c] sm:$0xf]
    %v524 = vld [vmem:[%s515 + $0x20] sm:$0xf]
    %v525 = vld [vmem:[%s515 + $0x24] sm:$0xf]
    %v526 = vld [vmem:[%s515 + $0x28] sm:$0xf]
    %v527 = vld [vmem:[%s515 + $0x2c] sm:$0xf]
    %v528 = vld [vmem:[%s515 + $0x30] sm:$0xf]
    %v529 = vld [vmem:[%s515 + $0x34] sm:$0xf]
    %v530 = vld [vmem:[%s515 + $0x38] sm:$0xf]
    %v531 = vld [vmem:[%s515 + $0x3c] sm:$0xf]
    %s532 = scalar_lea.vmem [#allocation7], 4
    %v533 = vld [vmem:[%s532] sm:$0x1]
    %v535 = vlaneseq
    %v536 = vshrl.u32 %v535, 7
    %v537 = vsub.s32 0, %v536
    %v538 = vrot.slane %v533, %v537
    %v556 = vunpack.c.l.b16 %v516
    %v557 = vunpack.c.l.b16 %v517
    %v558 = vunpack.c.l.b16 %v518
    %v559 = vunpack.c.l.b16 %v519
    %v560 = vunpack.c.l.b16 %v520
    %v561 = vunpack.c.l.b16 %v521
    %v562 = vunpack.c.l.b16 %v522
    %v563 = vunpack.c.l.b16 %v523
    %v564 = vunpack.c.l.b16 %v524
    %v565 = vunpack.c.l.b16 %v525
    %v566 = vunpack.c.l.b16 %v526
    %v567 = vunpack.c.l.b16 %v527
    %v568 = vunpack.c.l.b16 %v528
    %v569 = vunpack.c.l.b16 %v529
    %v570 = vunpack.c.l.b16 %v530
    %v571 = vunpack.c.l.b16 %v531
    %v572 = vpack.c.b16 %v557, %v556
    %v573 = vpack.c.b16 %v559, %v558
    %v574 = vpack.c.b16 %v561, %v560
    %v575 = vpack.c.b16 %v563, %v562
    %v576 = vpack.c.b16 %v565, %v564
    %v577 = vpack.c.b16 %v567, %v566
    %v578 = vpack.c.b16 %v569, %v568
    %v579 = vpack.c.b16 %v571, %v570
    %588 = vmatprep.subr.bf16.mxu0 0
    %589 = vmatpush1.bf16.msra.mxu0 %v579
    %590 = vmatprep.subr.bf16.mxu0 0
    %591 = vmatpush1.bf16.msra.mxu0 %v578
    %592 = vmatprep.subr.bf16.mxu0 0
    %593 = vmatpush1.bf16.msra.mxu0 %v577
    %594 = vmatprep.subr.bf16.mxu0 0
    %595 = vmatpush1.bf16.msra.mxu0 %v576
    %596 = vmatprep.subr.bf16.mxu0 0
    %597 = vmatpush1.bf16.msra.mxu0 %v575
    %598 = vmatprep.subr.bf16.mxu0 0
    %599 = vmatpush1.bf16.msra.mxu0 %v574
    %600 = vmatprep.subr.bf16.mxu0 0
    %601 = vmatpush1.bf16.msra.mxu0 %v573
    %602 = vmatprep.subr.bf16.mxu0 0
    %603 = vmatpush1.bf16.msra.mxu0 %v572
    %604 = vmatprep.subr.bf16.mxu0 0
    %605 = vmatpush2.bf16.msra.mxu0 0
    %606 = vmatprep.subr.bf16.mxu0 0
    %607 = vmatpush2.bf16.msra.mxu0 0
    %608 = vmatprep.subr.bf16.mxu0 0
    %609 = vmatpush2.bf16.msra.mxu0 0
    %610 = vmatprep.subr.bf16.mxu0 0
    %611 = vmatpush2.bf16.msra.mxu0 0
    %612 = vmatprep.subr.bf16.mxu0 0
    %613 = vmatpush2.bf16.msra.mxu0 0
    %614 = vmatprep.subr.bf16.mxu0 0
    %615 = vmatpush2.bf16.msra.mxu0 0
    %616 = vmatprep.subr.bf16.mxu0 0
    %617 = vmatpush2.bf16.msra.mxu0 0
    %618 = vmatprep.subr.bf16.mxu0 0
    %619 = vmatpush2.bf16.msra.mxu0 0
    %620 = vmatprep.mubr.bf16.mxu0 0
    %621 = vmatmul.mubr.bf16.gmra.mxu0 %v514
    %v622 = vpop.f32.mrf.mxu0
    %v623 = vadd.f32 %v538, %v622
    %v624 = vpop.f32.mrf.mxu0
    %v625 = vpop.f32.mrf.mxu0
    %v626 = vpop.f32.mrf.mxu0
    %627 = vdwg.mxu0
    %v628 = vtanh.pop %v623
    %v629 = vpack.c.bf16 %v628, %v628
    %s630 = scalar_lea.vmem [#allocation5], 320
    %v631 = vld [vmem:[%s630] sm:$0xf]
    %v632 = vld [vmem:[%s630 + $0x4] sm:$0xf]
    %v633 = vld [vmem:[%s630 + $0x8] sm:$0xf]
    %v634 = vld [vmem:[%s630 + $0xc] sm:$0xf]
    %v635 = vld [vmem:[%s630 + $0x10] sm:$0xf]
    %v636 = vld [vmem:[%s630 + $0x14] sm:$0xf]
    %v637 = vld [vmem:[%s630 + $0x18] sm:$0xf]
    %v638 = vld [vmem:[%s630 + $0x1c] sm:$0xf]
    %v639 = vld [vmem:[%s630 + $0x20] sm:$0xf]
    %v640 = vld [vmem:[%s630 + $0x24] sm:$0xf]
    %v641 = vld [vmem:[%s630 + $0x28] sm:$0xf]
    %v642 = vld [vmem:[%s630 + $0x2c] sm:$0xf]
    %v643 = vld [vmem:[%s630 + $0x30] sm:$0xf]
    %v644 = vld [vmem:[%s630 + $0x34] sm:$0xf]
    %v645 = vld [vmem:[%s630 + $0x38] sm:$0xf]
    %v646 = vld [vmem:[%s630 + $0x3c] sm:$0xf]
    %s647 = scalar_lea.vmem [#allocation7], 5
    %v648 = vld [vmem:[%s647] sm:$0x1]
    %v650 = vlaneseq
    %v651 = vshrl.u32 %v650, 7
    %v652 = vsub.s32 0, %v651
    %v653 = vrot.slane %v648, %v652
    %v671 = vunpack.c.l.b16 %v631
    %v672 = vunpack.c.l.b16 %v632
    %v673 = vunpack.c.l.b16 %v633
    %v674 = vunpack.c.l.b16 %v634
    %v675 = vunpack.c.l.b16 %v635
    %v676 = vunpack.c.l.b16 %v636
    %v677 = vunpack.c.l.b16 %v637
    %v678 = vunpack.c.l.b16 %v638
    %v679 = vunpack.c.l.b16 %v639
    %v680 = vunpack.c.l.b16 %v640
    %v681 = vunpack.c.l.b16 %v641
    %v682 = vunpack.c.l.b16 %v642
    %v683 = vunpack.c.l.b16 %v643
    %v684 = vunpack.c.l.b16 %v644
    %v685 = vunpack.c.l.b16 %v645
    %v686 = vunpack.c.l.b16 %v646
    %v687 = vpack.c.b16 %v672, %v671
    %v688 = vpack.c.b16 %v674, %v673
    %v689 = vpack.c.b16 %v676, %v675
    %v690 = vpack.c.b16 %v678, %v677
    %v691 = vpack.c.b16 %v680, %v679
    %v692 = vpack.c.b16 %v682, %v681
    %v693 = vpack.c.b16 %v684, %v683
    %v694 = vpack.c.b16 %v686, %v685
    %703 = vmatprep.subr.bf16.mxu0 0
    %704 = vmatpush1.bf16.msra.mxu0 %v694
    %705 = vmatprep.subr.bf16.mxu0 0
    %706 = vmatpush1.bf16.msra.mxu0 %v693
    %707 = vmatprep.subr.bf16.mxu0 0
    %708 = vmatpush1.bf16.msra.mxu0 %v692
    %709 = vmatprep.subr.bf16.mxu0 0
    %710 = vmatpush1.bf16.msra.mxu0 %v691
    %711 = vmatprep.subr.bf16.mxu0 0
    %712 = vmatpush1.bf16.msra.mxu0 %v690
    %713 = vmatprep.subr.bf16.mxu0 0
    %714 = vmatpush1.bf16.msra.mxu0 %v689
    %715 = vmatprep.subr.bf16.mxu0 0
    %716 = vmatpush1.bf16.msra.mxu0 %v688
    %717 = vmatprep.subr.bf16.mxu0 0
    %718 = vmatpush1.bf16.msra.mxu0 %v687
    %719 = vmatprep.subr.bf16.mxu0 0
    %720 = vmatpush2.bf16.msra.mxu0 0
    %721 = vmatprep.subr.bf16.mxu0 0
    %722 = vmatpush2.bf16.msra.mxu0 0
    %723 = vmatprep.subr.bf16.mxu0 0
    %724 = vmatpush2.bf16.msra.mxu0 0
    %725 = vmatprep.subr.bf16.mxu0 0
    %726 = vmatpush2.bf16.msra.mxu0 0
    %727 = vmatprep.subr.bf16.mxu0 0
    %728 = vmatpush2.bf16.msra.mxu0 0
    %729 = vmatprep.subr.bf16.mxu0 0
    %730 = vmatpush2.bf16.msra.mxu0 0
    %731 = vmatprep.subr.bf16.mxu0 0
    %732 = vmatpush2.bf16.msra.mxu0 0
    %733 = vmatprep.subr.bf16.mxu0 0
    %734 = vmatpush2.bf16.msra.mxu0 0
    %735 = vmatprep.mubr.bf16.mxu0 0
    %736 = vmatmul.mubr.bf16.gmra.mxu0 %v629
    %v737 = vpop.f32.mrf.mxu0
    %v738 = vadd.f32 %v653, %v737
    %v739 = vpop.f32.mrf.mxu0
    %v740 = vpop.f32.mrf.mxu0
    %v741 = vpop.f32.mrf.mxu0
    %742 = vdwg.mxu0
    %743 = vst [vmem:[#allocation8] sm:$0xff] %v738
    // Predicated region
    $region26: #{tpu_custom_call.1} parent=1 // pred_check
      _
    $region27: #{tpu_custom_call.1} parent=1 // pred_check_branch
      %745 = sbr.rel (0) target = $region29
    $region28: #{tpu_custom_call.1} parent=1 // pred_region
      %s747 = ssub.s32 128, 128
      %748 = vsyncadd [#allocation4], %s747
      %s750 = sshll.u32 [#allocation8], 4
      %s751 = int_to_ptr.vmem [resolvable:$true] %s750
      %753 = dma.vmem_to_hbm [thread:$0]  %s751, 128, %s3, [#allocation4]
    $region29: #{tpu_custom_call.1} parent=1 // pred_fallthru
      _
    // Predicated region
    $region30: #{tpu_custom_call.1} parent=1 // pred_check
      _
    $region31: #{tpu_custom_call.1} parent=1 // pred_check_branch
      %755 = sbr.rel (0) target = $region33
    $region32: #{tpu_custom_call.1} parent=1 // pred_region
      %756 = dma.done [#allocation4], 128
    $region33: #{tpu_custom_call.1} parent=1 // pred_fallthru
      _
    %757 = vsyncpa [#allocation3], 1
    %758 = vsyncpa [#allocation6], 1
    %759 = vsyncpa [#allocation4], 1

</llo_original>
